<compile_context>
chip_gen: v7x
topology: tpu7x:2x2x1
jax: 0.10.0
libtpu: 0.0.40
codegen_flags: <defaults>
</compile_context>

<pallas_src>
import numpy as np
import jax
import jax.numpy as jnp
from jax.experimental import pallas as pl
from jax.experimental.pallas import tpu as pltpu


def _adaptive_pool_matrix(in_size: int, out_size: int) -> np.ndarray:
    """Row-stochastic (out_size, in_size) matrix replicating PyTorch
    AdaptiveAvgPool window semantics (floor/ceil boundaries) along one axis."""
    P = np.zeros((out_size, in_size), dtype=np.float32)
    for i in range(out_size):
        start = (i * in_size) // out_size
        end = -((-(i + 1) * in_size) // out_size)  # ceil((i+1)*in/out)
        P[i, start:end] = 1.0 / float(end - start)
    return P


def _pick_row_tile(rows: int, row_bytes: int, budget: int = 4 << 20) -> int:
    """Largest row-tile (divisor of `rows`) whose block fits `budget`;
    prefers multiples of 8 for sublane alignment. Falls back to full rows."""
    max_rows = max(1, budget // max(row_bytes, 1))
    if rows <= max_rows:
        return rows
    best = 0
    for t in range(8, max_rows + 1, 8):
        if rows % t == 0:
            best = t
    return best if best > 0 else rows


def _side_pool_kernel(f_ref, pk_ref, o_ref):
    # f_ref:  (1, TC, P*H*W)   packed feature rows (P channels per row)
    # pk_ref: (P*H*W, P*m*m)   block-diagonal kron(P_h, P_w)^T
    # o_ref:  (1, TC, P*m*m)   lane-dense pooled output
    f = f_ref[0].astype(jnp.float32)
    pooled = jnp.dot(f, pk_ref[...], preferred_element_type=jnp.float32)
    o_ref[0] = pooled.astype(o_ref.dtype)


def side_pool(feature: jax.Array, x: jax.Array) -> jax.Array:
    """SidePool.forward(feature, x) = cat(AdaptiveAvgPool2d((m, m))(feature), x, 1)."""
    N, Cf, H, W = feature.shape
    m = int(x.shape[-1])
    mm = m * m
    K1 = H * W

    # Pack P channels per row so the store width P*mm is a multiple of 128
    # lanes (unmasked vst). Fall back to P=1 (still correct) otherwise.
    P = 1
    for cand in (1, 2, 4, 8):
        if (cand * mm) % 128 == 0 and Cf % cand == 0:
            P = cand
            break

    # Pooling matrix: pooled_flat = f_flat @ kron(ph, pw)^T, block-diagonal
    # over the P packed channels.
    ph = _adaptive_pool_matrix(H, m)                       # (m, H)
    pw = _adaptive_pool_matrix(W, m)                       # (m, W)
    pk1 = np.kron(ph, pw).T.astype(np.float32)             # (H*W, m*m)
    pk_np = np.zeros((P * K1, P * mm), dtype=np.float32)
    for p in range(P):
        pk_np[p * K1:(p + 1) * K1, p * mm:(p + 1) * mm] = pk1
    pk = jnp.asarray(pk_np)

    c_rows = Cf // P
    itemsize = feature.dtype.itemsize
    row_bytes = P * K1 * itemsize
    tc = _pick_row_tile(c_rows, row_bytes)                 # channel-row tile
    grid = (N, c_rows // tc)

    # Lane-dense views: contiguous (free) reshapes in the wrapper.
    feature_v = feature.reshape(N, c_rows, P * K1)

    # VMEM budget (double-buffered in/out blocks + Pk + f32 intermediates).
    feat_blk = tc * P * K1 * itemsize
    out_blk = tc * P * mm * itemsize
    inter = tc * P * (K1 + mm) * 4
    vmem_need = 2 * (feat_blk + out_blk) + 2 * pk_np.nbytes + inter
    vmem_limit = int(min(max(2 * vmem_need + (8 << 20), 16 << 20), 112 << 20))

    cost = pl.CostEstimate(
        flops=int(2.0 * N * c_rows * (P * K1) * (P * mm)),
        transcendentals=0,
        bytes_accessed=int(feature_v.size * itemsize
                           + N * c_rows * P * mm * itemsize
                           + pk_np.nbytes),
    )

    pooled_flat = pl.pallas_call(
        _side_pool_kernel,
        out_shape=jax.ShapeDtypeStruct((N, c_rows, P * mm), feature.dtype),
        grid_spec=pltpu.PrefetchScalarGridSpec(
            num_scalar_prefetch=0,
            grid=grid,
            in_specs=[
                pl.BlockSpec((1, tc, P * K1), lambda n, c: (n, c, 0)),
                pl.BlockSpec((P * K1, P * mm), lambda n, c: (0, 0)),
            ],
            out_specs=pl.BlockSpec((1, tc, P * mm), lambda n, c: (n, c, 0)),
        ),
        compiler_params=pltpu.CompilerParams(
            dimension_semantics=("parallel", "parallel"),
            vmem_limit_bytes=vmem_limit,
        ),
        cost_estimate=cost,
    )(feature_v, pk)

    pooled = pooled_flat.reshape(N, Cf, m, m)
    # Channel concat of the x pass-through is a plain HBM->HBM copy; let XLA
    # do it (bandwidth-optimal, keeps the kernel's VMEM footprint small).
    return jnp.concatenate([pooled, x], axis=1)


if __name__ == "__main__":
    key = jax.random.PRNGKey(0)
    kf, kx = jax.random.split(key)

    # feature: (N, C, H, W); x: (N, C, m, m) with m = x.size(-1) = 8
    feature = jax.random.normal(kf, (2, 4, 16, 16), dtype=jnp.float32)
    x = jax.random.normal(kx, (2, 4, 8, 8), dtype=jnp.float32)

    out = side_pool(feature, x)
    jax.block_until_ready(out)

    # Plain-JAX reference (same adaptive-window matrices) for sanity.
    ph = jnp.asarray(_adaptive_pool_matrix(16, 8))
    pw = jnp.asarray(_adaptive_pool_matrix(16, 8))
    pooled_ref = jnp.einsum('ih,nchw,jw->ncij', ph, feature, pw)
    ref = jnp.concatenate([pooled_ref, x], axis=1)
    assert out.shape == (2, 8, 8, 8)
    assert jnp.allclose(out, ref, atol=1e-5, rtol=1e-5), "Pallas output mismatch vs reference"

    print("KERNEL_OK")
</pallas_src>

<mosaic_0001>
module attributes {stable_mosaic.version = 11 : i64} {
  func.func @_side_pool_kernel(%arg0: i32, %arg1: i32, %arg2: memref<1x2x512xf32, #tpu.memory_space<vmem>>, %arg3: memref<512x128xf32, #tpu.memory_space<vmem>>, %arg4: memref<1x2x128xf32, #tpu.memory_space<vmem>>) attributes {dimension_semantics = [#tpu.dimension_semantics<parallel>, #tpu.dimension_semantics<parallel>], iteration_bounds = array<i64: 2, 1>, scalar_prefetch = 0 : i64, scratch_operands = 0 : i64, tpu.core_type = #tpu.core_type<tc>, window_params = [{transform_indices = @transform_0, window_bounds = array<i64: 1, 2, 512>}, {pipeline_mode = #tpu.pipeline_mode<synchronous>, transform_indices = @transform_1, window_bounds = array<i64: 512, 128>}, {transform_indices = @transform_2, window_bounds = array<i64: 1, 2, 128>}]} {
    %c0 = arith.constant 0 : index
    %c0_0 = arith.constant 0 : index
    %c0_1 = arith.constant 0 : index
    %0 = vector.load %arg2[%c0, %c0_0, %c0_1] : memref<1x2x512xf32, #tpu.memory_space<vmem>>, vector<1x2x512xf32>
    %1 = vector.shape_cast %0 : vector<1x2x512xf32> to vector<2x512xf32>
    %c0_2 = arith.constant 0 : index
    %c0_3 = arith.constant 0 : index
    %2 = vector.load %arg3[%c0_2, %c0_3] : memref<512x128xf32, #tpu.memory_space<vmem>>, vector<512x128xf32>
    %cst = arith.constant dense<0.000000e+00> : vector<2x128xf32>
    %3 = tpu.matmul %1, %2, %cst {dimension_numbers = #tpu.dot_dimension_numbers<[1], [0], [0], [1], [0, 0, 1, 1], [], []>} : vector<2x512xf32>, vector<512x128xf32>, vector<2x128xf32> -> vector<2x128xf32>
    %c0_4 = arith.constant 0 : index
    %c0_5 = arith.constant 0 : index
    %c0_6 = arith.constant 0 : index
    %4 = vector.load %arg4[%c0_4, %c0_5, %c0_6] : memref<1x2x128xf32, #tpu.memory_space<vmem>>, vector<1x2x128xf32>
    %5 = vector.shape_cast %4 : vector<1x2x128xf32> to vector<2x128xf32>
    %6 = vector.shape_cast %3 : vector<2x128xf32> to vector<1x2x128xf32>
    tpu.vector_store %arg4[%c0_4, %c0_5, %c0_6], %6 {strides = array<i32>} : memref<1x2x128xf32, #tpu.memory_space<vmem>>, vector<1x2x128xf32>,
    return
  }
  func.func @transform_0(%arg0: i32, %arg1: i32) -> (i32, i32, i32) {
    %c0_i32 = arith.constant 0 : i32
    %c0_i32_0 = arith.constant 0 : i32
    return %arg0, %arg1, %c0_i32 : i32, i32, i32
  }
  func.func @transform_1(%arg0: i32, %arg1: i32) -> (i32, i32) {
    %c0_i32 = arith.constant 0 : i32
    %c0_i32_0 = arith.constant 0 : i32
    %c0_i32_1 = arith.constant 0 : i32
    return %c0_i32, %c0_i32_0 : i32, i32
  }
  func.func @transform_2(%arg0: i32, %arg1: i32) -> (i32, i32, i32) {
    %c0_i32 = arith.constant 0 : i32
    %c0_i32_0 = arith.constant 0 : i32
    return %arg0, %arg1, %c0_i32 : i32, i32, i32
  }
}

</mosaic_0001>

<llo_original>
// kernel: tpu_custom_call.1
$region0: #{tpu_custom_call.1}
  #allocation0 [shape = 'u32[]', space=smem, size = 0x4, offset = 0x4, fixed_abs, tag = 'smem constant byte address 0x4 - core index']
  #allocation1 [shape = 'u32[144,128]{1,0:T(1,128)}', space=vmem, size = 0x12000, scoped, tag = 'internal scratch']
  %s0 = inlined_call_operand.hbm [shape: f32[2,2,512], index: 0, kind: input, shape index: {}]
  %s1 = inlined_call_operand.hbm [shape: f32[512,128], index: 1, kind: input, shape index: {}]
  %s2 = inlined_call_operand.hbm [shape: f32[2,2,128], index: 2, kind: output, shape index: {}]
  %s3 = sld [smem:[#allocation0]]
  $region49: #{tpu_custom_call.1} parent=0
    _
  %s5 = ssub.s32 1, %s3
  %s6 = scalar_select 0, %s5, %s3
  $region1: #{tpu_custom_call.1} parent=0
    #allocation2 [shape = 'u8[8192]{0}', space=vmem, size = 0x2000, scoped, tag = 'input window, operand 0']
    #allocation3 [shape = 's32[2]{0}', space=sflag, size = 0x8, scoped, tag = 'scoped memory for tpu_custom_call.1']
    #allocation4 [shape = 's32[2]{0}', space=sflag, size = 0x8, scoped, tag = 'scoped memory for tpu_custom_call.1']
    #allocation5 [shape = 'u8[262144]{0}', space=vmem, size = 0x40000, scoped, tag = 'input window, operand 1, single buffered']
    #allocation6 [shape = 's32[1]{0}', space=sflag, size = 0x4, scoped, tag = 'scoped memory for tpu_custom_call.1']
    #allocation7 [shape = 'u8[2048]{0}', space=vmem, size = 0x800, scoped, tag = 'output window, operand 0']
    %7 = vsyncpa [#allocation3], 0
    %s8 = scalar_lea.sflag [#allocation3], 1
    %9 = vsyncpa %s8, 0
    %10 = vsyncpa [#allocation6], 0
    %11 = vsyncpa [#allocation4], 0
    %s12 = scalar_lea.sflag [#allocation4], 1
    %13 = vsyncpa %s12, 0
    loop: start=0, step=1, limit=4
    $region2: #{tpu_custom_call.1} parent=1 // loop_pre_header
      _
    $region3: #{tpu_custom_call.1} parent=1 // loop_header
      %s15 = sphi 0, %s19
      %p16 = scmp.ge.s32.totalorder %s15, 4
      %s22 = sphi 0, %s34
      %s23 = sphi 0, %s30
      %s24 = sphi 0, %s22
      %s25 = sphi 0, %s23
      %s26 = sphi 0, %s24
      %s27 = sphi 0, %s25
      %s39 = sphi 0, %s41
      %s42 = sphi 0, %s39
      %s43 = sphi 0, %s42
      %s59 = sphi 0, %s43
      %s63 = sphi 0, %s63
      %s65 = sphi 0, %s63
      %s66 = sphi 0, %s65
      %s80 = sphi 0, %s66
      %s88 = sphi 0, %s90
      %s91 = sphi 0, %s88
      %s92 = sphi 0, %s91
      %s108 = sphi 0, %s92
    $region4: #{tpu_custom_call.1} parent=1 // loop_header_branch
      %18 = sbr.rel (%p16) target = $region8
    $region5: #{tpu_custom_call.1} parent=1 // loop_body
      %s20 = ssub.s32 %s15, 1
      %s21 = ssub.s32 %s15, 2
      %s28 = sadd.s32 1, %s23
      %p29 = scmp.ge.s32.totalorder %s28, 1
      %s30 = scalar_select %p29, 0, %s28
      %s31 = sadd.s32 1, %s22
      %s32 = scalar_select %p29, %s31, %s22
      %p33 = scmp.ge.s32.totalorder %s32, 2
      %s34 = scalar_select %p33, 0, %s32
      %s35 = ssub.s32 %s22, %s34
      %s36 = ssub.s32 %s23, %s30
      %s37 = sor.u32 %s35, %s36
      %p38 = scmp.eq.s32.totalorder %s37, 0
      %s40 = sadd.s32 %s39, 1
      %s41 = scalar_select %p38, %s39, %s40
      %p44 = pneg %p38
      %p45 = scmp.eq.s32.totalorder %s15, 1
      %p46 = por %p44, %p45
      %p47 = scmp.ne.s32.totalorder %s39, %s42
      %p48 = scmp.eq.s32.totalorder %s15, 0
      %p49 = por %p47, %p48
      %p50 = scmp.ne.s32.totalorder %s39, %s42
      %p51 = scmp.eq.s32.totalorder %s20, 1
      %p52 = por %p50, %p51
      %p53 = scmp.ne.s32.totalorder %s42, %s43
      %p54 = scmp.eq.s32.totalorder %s20, 0
      %p55 = por %p53, %p54
      %p56 = scmp.ne.s32.totalorder %s42, %s43
      %p57 = scmp.eq.s32.totalorder %s21, 1
      %p58 = por %p56, %p57
      %p60 = scmp.ne.s32.totalorder %s43, %s59
      %p61 = scmp.eq.s32.totalorder %s21, 0
      %p62 = por %p60, %p61
      %s64 = sadd.s32 %s63, 1
      %p67 = scmp.eq.s32.totalorder %s15, 1
      %p68 = scmp.ne.s32.totalorder %s63, %s65
      %p69 = scmp.eq.s32.totalorder %s15, 0
      %p70 = por %p68, %p69
      %p71 = scmp.ne.s32.totalorder %s63, %s65
      %p72 = scmp.eq.s32.totalorder %s20, 1
      %p73 = por %p71, %p72
      %p74 = scmp.ne.s32.totalorder %s65, %s66
      %p75 = scmp.eq.s32.totalorder %s20, 0
      %p76 = por %p74, %p75
      %p77 = scmp.ne.s32.totalorder %s65, %s66
      %p78 = scmp.eq.s32.totalorder %s21, 1
      %p79 = por %p77, %p78
      %p81 = scmp.ne.s32.totalorder %s66, %s80
      %p82 = scmp.eq.s32.totalorder %s21, 0
      %p83 = por %p81, %p82
      %s84 = ssub.s32 %s22, %s34
      %s85 = ssub.s32 %s23, %s30
      %s86 = sor.u32 %s84, %s85
      %p87 = scmp.eq.s32.totalorder %s86, 0
      %s89 = sadd.s32 %s88, 1
      %s90 = scalar_select %p87, %s88, %s89
      %p93 = pneg %p87
      %p94 = scmp.eq.s32.totalorder %s15, 1
      %p95 = por %p93, %p94
      %p96 = scmp.ne.s32.totalorder %s88, %s91
      %p97 = scmp.eq.s32.totalorder %s15, 0
      %p98 = por %p96, %p97
      %p99 = scmp.ne.s32.totalorder %s88, %s91
      %p100 = scmp.eq.s32.totalorder %s20, 1
      %p101 = por %p99, %p100
      %p102 = scmp.ne.s32.totalorder %s91, %s92
      %p103 = scmp.eq.s32.totalorder %s20, 0
      %p104 = por %p102, %p103
      %p105 = scmp.ne.s32.totalorder %s91, %s92
      %p106 = scmp.eq.s32.totalorder %s21, 1
      %p107 = por %p105, %p106
      %p109 = scmp.ne.s32.totalorder %s92, %s108
      %p110 = scmp.eq.s32.totalorder %s21, 0
      %p111 = por %p109, %p110
      %p112 = scmp.le.s32.totalorder 1, %s15
      %p113 = scmp.lt.s32.totalorder %s15, 3
      %p114 = pnand %p112, %p113
      %p115 = pneg %p114
      // Predicated region
      $region9: #{tpu_custom_call.1} parent=5 // pred_check
        _
      $region10: #{tpu_custom_call.1} parent=5 // pred_check_branch
        %117 = sbr.rel (%p114) target = $region12
      $region11: #{tpu_custom_call.1} parent=5 // pred_region
        %s118 = ssub.s32 %s15, 1
        // Predicated region
        $region13: #{tpu_custom_call.1} parent=11 // pred_check
          %p119 = pneg %p76
        $region14: #{tpu_custom_call.1} parent=11 // pred_check_branch
          %121 = sbr.rel (%p119) target = $region16
        $region15: #{tpu_custom_call.1} parent=11 // pred_region
          %s123 = ssub.s32 8192, 8192
          %124 = vsyncadd [#allocation6], %s123
          %s125 = sshll.u32 [#allocation5], 4
          %s126 = int_to_ptr.vmem [resolvable:$true] %s125
          %131 = dma.hbm_to_vmem [thread:$0]  %s1, 8192, %s126, [#allocation6], 128, 128, 8
        $region16: #{tpu_custom_call.1} parent=11 // pred_fallthru
          _
      $region12: #{tpu_custom_call.1} parent=5 // pred_fallthru
        _
      %p132 = scmp.lt.s32.totalorder %s15, 2
      // Predicated region
      $region17: #{tpu_custom_call.1} parent=5 // pred_check
        %p133 = pneg %p132
      $region18: #{tpu_custom_call.1} parent=5 // pred_check_branch
        %135 = sbr.rel (%p133) target = $region20
      $region19: #{tpu_custom_call.1} parent=5 // pred_region
        // Predicated region
        $region21: #{tpu_custom_call.1} parent=19 // pred_check
          %p136 = pneg %p49
        $region22: #{tpu_custom_call.1} parent=19 // pred_check_branch
          %138 = sbr.rel (%p136) target = $region24
        $region23: #{tpu_custom_call.1} parent=19 // pred_region
          %s139 = sand.u32 %s39, 1
          %s140 = scalar_lea.sflag [#allocation3], %s139
          %s141 = sand.u32 %s39, 1
          %s142 = smul.addr %s141, 8
          %s143 = scalar_lea.vmem [#allocation2], %s142
          %s145 = ssub.s32 128, 128
          %146 = vsyncadd %s140, %s145
          %s147 = smul.addr %s23, 4
          %s148 = smul.addr %s22, 4
          %s149 = sadd.s32 %s147, %s148
          %s150 = smul.addr %s149, 32
          %s151 = scalar_lea.hbm %s0, %s150
          %s153 = sshll.u32 %s143, 4
          %s154 = int_to_ptr.vmem [resolvable:$true] %s153
          %156 = dma.hbm_to_vmem [thread:$0]  %s151, 128, %s154, %s140
        $region24: #{tpu_custom_call.1} parent=19 // pred_fallthru
          _
      $region20: #{tpu_custom_call.1} parent=5 // pred_fallthru
        _
      %p157 = scmp.le.s32.totalorder 1, %s15
      %p158 = scmp.lt.s32.totalorder %s15, 3
      %p159 = pnand %p157, %p158
      %p160 = pneg %p159
      // Predicated region
      $region25: #{tpu_custom_call.1} parent=5 // pred_check
        _
      $region26: #{tpu_custom_call.1} parent=5 // pred_check_branch
        %162 = sbr.rel (%p159) target = $region28
      $region27: #{tpu_custom_call.1} parent=5 // pred_region
        %s163 = ssub.s32 %s15, 1
        %s164 = sand.u32 %s42, 1
        %s165 = scalar_lea.sflag [#allocation3], %s164
        %s166 = sand.u32 %s42, 1
        %s167 = smul.addr %s166, 8
        %s168 = scalar_lea.vmem [#allocation2], %s167
        // Predicated region
        $region29: #{tpu_custom_call.1} parent=27 // pred_check
          %p169 = pneg %p55
        $region30: #{tpu_custom_call.1} parent=27 // pred_check_branch
          %171 = sbr.rel (%p169) target = $region32
        $region31: #{tpu_custom_call.1} parent=27 // pred_region
          %172 = dma.done %s165, 128
        $region32: #{tpu_custom_call.1} parent=27 // pred_fallthru
          _
        // Predicated region
        $region33: #{tpu_custom_call.1} parent=27 // pred_check
          %p173 = pneg %p76
        $region34: #{tpu_custom_call.1} parent=27 // pred_check_branch
          %175 = sbr.rel (%p173) target = $region36
        $region35: #{tpu_custom_call.1} parent=27 // pred_region
          %176 = dma.done [#allocation6], 8192
        $region36: #{tpu_custom_call.1} parent=27 // pred_fallthru
          _
        %s177 = sand.u32 %s42, 1
        %s178 = scalar_lea.sflag [#allocation3], %s177
        %s179 = sand.u32 %s42, 1
        %s180 = smul.addr %s179, 8
        %s181 = scalar_lea.vmem [#allocation2], %s180
        %p182 = pneg %p55
        %p183 = pneg %p52
        %p184 = pneg %p76
        %p185 = pneg %p73
        %p186 = pneg %p104
        %p187 = pneg %p101
        %s188 = sand.u32 %s91, 1
        %s189 = scalar_lea.sflag [#allocation4], %s188
        %s190 = sand.u32 %s91, 1
        %s191 = smul.addr %s190, 2
        %s192 = scalar_lea.vmem [#allocation7], %s191
        %v193 = vld [vmem:[%s168] sm:$0xff]
        %v194 = vld [vmem:[#allocation5] sm:$0xff]
        %v195 = vld [vmem:[#allocation5 + $0x8] sm:$0xff]
        %v196 = vld [vmem:[#allocation5 + $0x10] sm:$0xff]
        %v197 = vld [vmem:[#allocation5 + $0x18] sm:$0xff]
        %v198 = vld [vmem:[#allocation5 + $0x20] sm:$0xff]
        %v199 = vld [vmem:[#allocation5 + $0x28] sm:$0xff]
        %v200 = vld [vmem:[#allocation5 + $0x30] sm:$0xff]
        %v201 = vld [vmem:[#allocation5 + $0x38] sm:$0xff]
        %v202 = vld [vmem:[#allocation5 + $0x40] sm:$0xff]
        %v203 = vld [vmem:[#allocation5 + $0x48] sm:$0xff]
        %v204 = vld [vmem:[#allocation5 + $0x50] sm:$0xff]
        %v205 = vld [vmem:[#allocation5 + $0x58] sm:$0xff]
        %v206 = vld [vmem:[#allocation5 + $0x60] sm:$0xff]
        %v207 = vld [vmem:[#allocation5 + $0x68] sm:$0xff]
        %v208 = vld [vmem:[#allocation5 + $0x70] sm:$0xff]
        %v209 = vld [vmem:[#allocation5 + $0x78] sm:$0xff]
        %v210 = vld [vmem:[#allocation5 + $0x80] sm:$0xff]
        %v211 = vld [vmem:[#allocation5 + $0x88] sm:$0xff]
        %v212 = vld [vmem:[#allocation5 + $0x90] sm:$0xff]
        %v213 = vld [vmem:[#allocation5 + $0x98] sm:$0xff]
        %v214 = vld [vmem:[#allocation5 + $0xa0] sm:$0xff]
        %v215 = vld [vmem:[#allocation5 + $0xa8] sm:$0xff]
        %v216 = vld [vmem:[#allocation5 + $0xb0] sm:$0xff]
        %v217 = vld [vmem:[#allocation5 + $0xb8] sm:$0xff]
        %v218 = vld [vmem:[#allocation5 + $0xc0] sm:$0xff]
        %v219 = vld [vmem:[#allocation5 + $0xc8] sm:$0xff]
        %v220 = vld [vmem:[#allocation5 + $0xd0] sm:$0xff]
        %v221 = vld [vmem:[#allocation5 + $0xd8] sm:$0xff]
        %v222 = vld [vmem:[#allocation5 + $0xe0] sm:$0xff]
        %v223 = vld [vmem:[#allocation5 + $0xe8] sm:$0xff]
        %v224 = vld [vmem:[#allocation5 + $0xf0] sm:$0xff]
        %v225 = vld [vmem:[#allocation5 + $0xf8] sm:$0xff]
        %v226 = vld [vmem:[#allocation5 + $0x100] sm:$0xff]
        %v227 = vld [vmem:[#allocation5 + $0x108] sm:$0xff]
        %v228 = vld [vmem:[#allocation5 + $0x110] sm:$0xff]
        %v229 = vld [vmem:[#allocation5 + $0x118] sm:$0xff]
        %v230 = vld [vmem:[#allocation5 + $0x120] sm:$0xff]
        %v231 = vld [vmem:[#allocation5 + $0x128] sm:$0xff]
        %v232 = vld [vmem:[#allocation5 + $0x130] sm:$0xff]
        %v233 = vld [vmem:[#allocation5 + $0x138] sm:$0xff]
        %v234 = vld [vmem:[#allocation5 + $0x140] sm:$0xff]
        %v235 = vld [vmem:[#allocation5 + $0x148] sm:$0xff]
        %v236 = vld [vmem:[#allocation5 + $0x150] sm:$0xff]
        %v237 = vld [vmem:[#allocation5 + $0x158] sm:$0xff]
        %v238 = vld [vmem:[#allocation5 + $0x160] sm:$0xff]
        %v239 = vld [vmem:[#allocation5 + $0x168] sm:$0xff]
        %v240 = vld [vmem:[#allocation5 + $0x170] sm:$0xff]
        %v241 = vld [vmem:[#allocation5 + $0x178] sm:$0xff]
        %v242 = vld [vmem:[#allocation5 + $0x180] sm:$0xff]
        %v243 = vld [vmem:[#allocation5 + $0x188] sm:$0xff]
        %v244 = vld [vmem:[#allocation5 + $0x190] sm:$0xff]
        %v245 = vld [vmem:[#allocation5 + $0x198] sm:$0xff]
        %v246 = vld [vmem:[#allocation5 + $0x1a0] sm:$0xff]
        %v247 = vld [vmem:[#allocation5 + $0x1a8] sm:$0xff]
        %v248 = vld [vmem:[#allocation5 + $0x1b0] sm:$0xff]
        %v249 = vld [vmem:[#allocation5 + $0x1b8] sm:$0xff]
        %v250 = vld [vmem:[#allocation5 + $0x1c0] sm:$0xff]
        %v251 = vld [vmem:[#allocation5 + $0x1c8] sm:$0xff]
        %v252 = vld [vmem:[#allocation5 + $0x1d0] sm:$0xff]
        %v253 = vld [vmem:[#allocation5 + $0x1d8] sm:$0xff]
        %v254 = vld [vmem:[#allocation5 + $0x1e0] sm:$0xff]
        %v255 = vld [vmem:[#allocation5 + $0x1e8] sm:$0xff]
        %v256 = vld [vmem:[#allocation5 + $0x1f0] sm:$0xff]
        %v257 = vld [vmem:[#allocation5 + $0x1f8] sm:$0xff]
        %v259 = vcombine.high %v193, %v193
        %v261 = vunpack.c.l.s4 1983009808
        %v262 = vunpack.c.0.s8 %v261
        %v263 = vlaneseq
        %v264 = vshrl.u32 %v263, 7
        %v265 = vsub.s32 %v262, %v264
        %v266 = vrot.slane %v193, %v265
        %v268 = vunpack.c.l.s4 1983009808
        %v269 = vunpack.c.0.s8 %v268
        %v270 = vlaneseq
        %v271 = vshrl.u32 %v270, 7
        %v272 = vsub.s32 %v269, %v271
        %v273 = vrot.slane %v259, %v272
        %v274 = vcombine.high %v266, %v266
        %v275 = vcombine.high %v273, %v273
        %280 = vmatprep.subr.mxu0 0.0
        %281 = vmatpush1.msra.mxu0 %v194
        %282 = vmatprep.subr.mxu0 0.0
        %283 = vmatpush1.msra.mxu0 %v195
        %284 = vmatprep.subr.mxu0 0.0
        %285 = vmatpush1.msra.mxu0 %v196
        %286 = vmatprep.subr.mxu0 0.0
        %287 = vmatpush1.msra.mxu0 %v197
        %288 = vmatprep.subr.mxu0 0.0
        %289 = vmatpush1.msra.mxu0 %v198
        %290 = vmatprep.subr.mxu0 0.0
        %291 = vmatpush1.msra.mxu0 %v199
        %292 = vmatprep.subr.mxu0 0.0
        %293 = vmatpush1.msra.mxu0 %v200
        %294 = vmatprep.subr.mxu0 0.0
        %295 = vmatpush1.msra.mxu0 %v201
        %296 = vmatprep.subr.mxu0 0.0
        %297 = vmatpush1.msra.mxu0 %v202
        %298 = vmatprep.subr.mxu0 0.0
        %299 = vmatpush1.msra.mxu0 %v203
        %300 = vmatprep.subr.mxu0 0.0
        %301 = vmatpush1.msra.mxu0 %v204
        %302 = vmatprep.subr.mxu0 0.0
        %303 = vmatpush1.msra.mxu0 %v205
        %304 = vmatprep.subr.mxu0 0.0
        %305 = vmatpush1.msra.mxu0 %v206
        %306 = vmatprep.subr.mxu0 0.0
        %307 = vmatpush1.msra.mxu0 %v207
        %308 = vmatprep.subr.mxu0 0.0
        %309 = vmatpush1.msra.mxu0 %v208
        %310 = vmatprep.subr.mxu0 0.0
        %311 = vmatpush1.msra.mxu0 %v209
        %312 = vmatprep.subr.mxu0 0.0
        %313 = vmatpush1.msra.mxu0 %v210
        %314 = vmatprep.subr.mxu0 0.0
        %315 = vmatpush1.msra.mxu0 %v211
        %316 = vmatprep.subr.mxu0 0.0
        %317 = vmatpush1.msra.mxu0 %v212
        %318 = vmatprep.subr.mxu0 0.0
        %319 = vmatpush1.msra.mxu0 %v213
        %320 = vmatprep.subr.mxu0 0.0
        %321 = vmatpush1.msra.mxu0 %v214
        %322 = vmatprep.subr.mxu0 0.0
        %323 = vmatpush1.msra.mxu0 %v215
        %324 = vmatprep.subr.mxu0 0.0
        %325 = vmatpush1.msra.mxu0 %v216
        %326 = vmatprep.subr.mxu0 0.0
        %327 = vmatpush1.msra.mxu0 %v217
        %328 = vmatprep.subr.mxu0 0.0
        %329 = vmatpush1.msra.mxu0 %v218
        %330 = vmatprep.subr.mxu0 0.0
        %331 = vmatpush1.msra.mxu0 %v219
        %332 = vmatprep.subr.mxu0 0.0
        %333 = vmatpush1.msra.mxu0 %v220
        %334 = vmatprep.subr.mxu0 0.0
        %335 = vmatpush1.msra.mxu0 %v221
        %336 = vmatprep.subr.mxu0 0.0
        %337 = vmatpush1.msra.mxu0 %v222
        %338 = vmatprep.subr.mxu0 0.0
        %339 = vmatpush1.msra.mxu0 %v223
        %340 = vmatprep.subr.mxu0 0.0
        %341 = vmatpush1.msra.mxu0 %v224
        %342 = vmatprep.subr.mxu0 0.0
        %343 = vmatpush1.msra.mxu0 %v225
        %344 = vmatprep.mubr.f32.mxu0 %v274
        %345 = vmatmul.mubr.f32.gmra.mrb[0].mxu0 %v266
        %v346 = vpop.f32.mrb[0].mxu0
        %v347 = vadd.f32 0.0, %v346
        %v348 = vpop.f32.mrb[0].mxu0
        %349 = vdwg.mxu0
        %350 = vmatprep.subr.mxu0 0.0
        %351 = vmatpush1.msra.mxu0 %v226
        %352 = vmatprep.subr.mxu0 0.0
        %353 = vmatpush1.msra.mxu0 %v227
        %354 = vmatprep.subr.mxu0 0.0
        %355 = vmatpush1.msra.mxu0 %v228
        %356 = vmatprep.subr.mxu0 0.0
        %357 = vmatpush1.msra.mxu0 %v229
        %358 = vmatprep.subr.mxu0 0.0
        %359 = vmatpush1.msra.mxu0 %v230
        %360 = vmatprep.subr.mxu0 0.0
        %361 = vmatpush1.msra.mxu0 %v231
        %362 = vmatprep.subr.mxu0 0.0
        %363 = vmatpush1.msra.mxu0 %v232
        %364 = vmatprep.subr.mxu0 0.0
        %365 = vmatpush1.msra.mxu0 %v233
        %366 = vmatprep.subr.mxu0 0.0
        %367 = vmatpush1.msra.mxu0 %v234
        %368 = vmatprep.subr.mxu0 0.0
        %369 = vmatpush1.msra.mxu0 %v235
        %370 = vmatprep.subr.mxu0 0.0
        %371 = vmatpush1.msra.mxu0 %v236
        %372 = vmatprep.subr.mxu0 0.0
        %373 = vmatpush1.msra.mxu0 %v237
        %374 = vmatprep.subr.mxu0 0.0
        %375 = vmatpush1.msra.mxu0 %v238
        %376 = vmatprep.subr.mxu0 0.0
        %377 = vmatpush1.msra.mxu0 %v239
        %378 = vmatprep.subr.mxu0 0.0
        %379 = vmatpush1.msra.mxu0 %v240
        %380 = vmatprep.subr.mxu0 0.0
        %381 = vmatpush1.msra.mxu0 %v241
        %382 = vmatprep.subr.mxu0 0.0
        %383 = vmatpush1.msra.mxu0 %v242
        %384 = vmatprep.subr.mxu0 0.0
        %385 = vmatpush1.msra.mxu0 %v243
        %386 = vmatprep.subr.mxu0 0.0
        %387 = vmatpush1.msra.mxu0 %v244
        %388 = vmatprep.subr.mxu0 0.0
        %389 = vmatpush1.msra.mxu0 %v245
        %390 = vmatprep.subr.mxu0 0.0
        %391 = vmatpush1.msra.mxu0 %v246
        %392 = vmatprep.subr.mxu0 0.0
        %393 = vmatpush1.msra.mxu0 %v247
        %394 = vmatprep.subr.mxu0 0.0
        %395 = vmatpush1.msra.mxu0 %v248
        %396 = vmatprep.subr.mxu0 0.0
        %397 = vmatpush1.msra.mxu0 %v249
        %398 = vmatprep.subr.mxu0 0.0
        %399 = vmatpush1.msra.mxu0 %v250
        %400 = vmatprep.subr.mxu0 0.0
        %401 = vmatpush1.msra.mxu0 %v251
        %402 = vmatprep.subr.mxu0 0.0
        %403 = vmatpush1.msra.mxu0 %v252
        %404 = vmatprep.subr.mxu0 0.0
        %405 = vmatpush1.msra.mxu0 %v253
        %406 = vmatprep.subr.mxu0 0.0
        %407 = vmatpush1.msra.mxu0 %v254
        %408 = vmatprep.subr.mxu0 0.0
        %409 = vmatpush1.msra.mxu0 %v255
        %410 = vmatprep.subr.mxu0 0.0
        %411 = vmatpush1.msra.mxu0 %v256
        %412 = vmatprep.subr.mxu0 0.0
        %413 = vmatpush1.msra.mxu0 %v257
        %414 = vmatprep.mubr.f32.mxu0 %v275
        %415 = vmatmul.mubr.f32.gmra.mrb[0].mxu0 %v273
        %v416 = vpop.f32.mrb[0].mxu0
        %v417 = vadd.f32 %v347, %v416
        %v418 = vpop.f32.mrb[0].mxu0
        %419 = vdwg.mxu0
        %420 = vst [vmem:[%s192] sm:$0x3] %v417
        %s421 = sand.u32 %s91, 1
        %s422 = scalar_lea.sflag [#allocation4], %s421
        %s423 = sand.u32 %s91, 1
        %s424 = smul.addr %s423, 2
        %s425 = scalar_lea.vmem [#allocation7], %s424
        // Predicated region
        $region37: #{tpu_custom_call.1} parent=27 // pred_check
          %p426 = pneg %p101
        $region38: #{tpu_custom_call.1} parent=27 // pred_check_branch
          %428 = sbr.rel (%p426) target = $region40
        $region39: #{tpu_custom_call.1} parent=27 // pred_region
          %s430 = ssub.s32 32, 32
          %431 = vsyncadd %s422, %s430
          %s432 = sadd.s32 %s25, %s24
          %s433 = smul.addr %s432, 32
          %s434 = scalar_lea.hbm %s2, %s433
          %s436 = sshll.u32 %s425, 4
          %s437 = int_to_ptr.vmem [resolvable:$true] %s436
          %439 = dma.vmem_to_hbm [thread:$0]  %s437, 32, %s434, %s422
        $region40: #{tpu_custom_call.1} parent=27 // pred_fallthru
          _
      $region28: #{tpu_custom_call.1} parent=5 // pred_fallthru
        _
      %p440 = scmp.le.s32.totalorder 2, %s15
      // Predicated region
      $region41: #{tpu_custom_call.1} parent=5 // pred_check
        %p441 = pneg %p440
      $region42: #{tpu_custom_call.1} parent=5 // pred_check_branch
        %443 = sbr.rel (%p441) target = $region44
      $region43: #{tpu_custom_call.1} parent=5 // pred_region
        %s444 = ssub.s32 %s15, 2
        // Predicated region
        $region45: #{tpu_custom_call.1} parent=43 // pred_check
          %p445 = pneg %p107
        $region46: #{tpu_custom_call.1} parent=43 // pred_check_branch
          %447 = sbr.rel (%p445) target = $region48
        $region47: #{tpu_custom_call.1} parent=43 // pred_region
          %s448 = sand.u32 %s92, 1
          %s449 = scalar_lea.sflag [#allocation4], %s448
          %s450 = sand.u32 %s92, 1
          %s451 = smul.addr %s450, 2
          %s452 = scalar_lea.vmem [#allocation7], %s451
          %453 = dma.done %s449, 32
        $region48: #{tpu_custom_call.1} parent=43 // pred_fallthru
          _
      $region44: #{tpu_custom_call.1} parent=5 // pred_fallthru
        _
    $region6: #{tpu_custom_call.1} parent=1 // loop_footer
      %s19 = sadd.s32 1, %s15
    $region7: #{tpu_custom_call.1} parent=1 // loop_footer_branch
      %14 = sbr.rel target = $region3
    $region8: #{tpu_custom_call.1} parent=1 // loop_exit
      _
    %454 = vsyncpa [#allocation3], 1
    %s455 = scalar_lea.sflag [#allocation3], 1
    %456 = vsyncpa %s455, 1
    %457 = vsyncpa [#allocation6], 1
    %458 = vsyncpa [#allocation4], 1
    %s459 = scalar_lea.sflag [#allocation4], 1
    %460 = vsyncpa %s459, 1

</llo_original>
